<compile_context>
chip_gen: v7x
topology: tpu7x:2x2x1
jax: 0.10.0
libtpu: 0.0.40
codegen_flags: <defaults>
</compile_context>

<pallas_src>
import functools

import jax
import jax.numpy as jnp
from jax.experimental import pallas as pl
from jax.experimental.pallas import tpu as pltpu

BN_EPS = 1e-5
_HEADROOM_BYTES = 4 * 1024 * 1024


# ---------------------------------------------------------------------------
# Sizing helpers
# ---------------------------------------------------------------------------
def _derive_vmem_limit_bytes():
    """~3/4 of physical VMEM: ~96 MiB on v5e/v6e (128 MiB), ~48 MiB on v7x (64 MiB)."""
    cap = 0
    try:
        cap = int(getattr(pltpu.get_tpu_info(), "vmem_capacity_bytes", 0) or 0)
    except Exception:
        cap = 0
    if cap <= 0:
        cap = 64 * 1024 * 1024  # conservative fallback = v7x per-TC physical VMEM
    return max(min((cap * 3) // 4, 112 * 1024 * 1024), 16 * 1024 * 1024)


def _choose_c_tile(c):
    """Channel tile: multiple of 8 (or full C). Prefer fat tiles, but keep the
    parallel channel grid >= 2 and even for v7x two-TensorCore balance."""
    if c % 8 != 0:
        return c  # block dim == full array dim is always a legal layout
    for ct in (32, 16, 8):
        if c % ct == 0 and (c // ct) >= 2 and (c // ct) % 2 == 0:
            return ct
    for ct in (32, 16, 8):
        if c % ct == 0 and (c // ct) >= 2:
            return ct
    for ct in (32, 16, 8):
        if c % ct == 0:
            return ct
    return c


def _choose_stream_block(n, c_tile, hw, elem_budget):
    """(n_blk, m_blk) for a streaming (n_blk, c_tile, m_blk) x block within budget."""
    if n * c_tile * hw <= elem_budget:
        return n, hw
    if hw % 128 == 0:
        # Lane-dense HW tiling with full N first.
        max_m = elem_budget // (n * c_tile)
        if max_m >= 128:
            m = min((max_m // 128) * 128, hw)
            while m >= 128 and hw % m != 0:
                m -= 128
            if m >= 128:
                return n, m
        # Even (N, c_tile, 128) is too large: tile N as well.
        nb = max(elem_budget // (c_tile * 128), 1)
        nb = min(nb, n)
        while nb > 1 and n % nb != 0:
            nb -= 1
        return nb, 128
    # H*W not lane-aligned: keep the full (legal) last dim and tile N instead.
    # TODO(synk): for hw < 128 the stores are masked partial stores; a lane-padded
    # layout would restore full store rate at the cost of an extra HBM pad pass.
    nb = max(elem_budget // (c_tile * hw), 1)
    nb = min(nb, n)
    while nb > 1 and n % nb != 0:
        nb -= 1
    return nb, hw


# ---------------------------------------------------------------------------
# Kernels
# ---------------------------------------------------------------------------
def _bn_mask_single_read_kernel(inv_count, x_ref, p_ref, o_ref):
    """Stats + normalize in one visit. x_ref: (N, c_tile, HW); p_ref: (c_tile, 3)."""
    x = x_ref[...].astype(jnp.float32)
    # TODO(synk): on v7x, fuse the sum / sum-of-squares into one traversal of x
    # (fori_loop over N) to cut VMEM re-read traffic; HBM binds on v5e/v6e anyway.
    xs = jnp.sum(x, axis=0)                       # (c_tile, HW)
    xsq = jnp.sum(x * x, axis=0)                  # (c_tile, HW)
    mean = jnp.sum(xs, axis=1, keepdims=True) * inv_count          # (c_tile, 1)
    var = jnp.sum(xsq, axis=1, keepdims=True) * inv_count - mean * mean
    var = jnp.maximum(var, 0.0)                   # guard E[x^2]-mean^2 cancellation
    inv_std = jax.lax.rsqrt(var + BN_EPS)

    p = p_ref[...]                                # (c_tile, 3) = [weight, bias, mask]
    wgt, bia, msk = p[:, 0:1], p[:, 1:2], p[:, 2:3]
    scale = (inv_std * wgt * msk)[None]           # (1, c_tile, 1)
    shift = ((bia - mean * inv_std * wgt) * msk)[None]
    o_ref[...] = (x * scale + shift).astype(o_ref.dtype)   # 2 VPU ops / element


def _bn_mask_stats_kernel(inv_count, x_ref, p_ref, ss_ref, sum_sc, sumsq_sc):
    """Grid (C_tiles, N_tiles, HW_tiles): accumulate per-channel sum/sumsq, then fold
    weight/bias/mask into a (c_tile, 2) [scale, shift] output on the last step."""
    ni = pl.program_id(1)
    mi = pl.program_id(2)

    @pl.when(jnp.logical_and(ni == 0, mi == 0))
    def _init():
        sum_sc[...] = jnp.zeros_like(sum_sc)
        sumsq_sc[...] = jnp.zeros_like(sumsq_sc)

    x = x_ref[...].astype(jnp.float32)            # (n_blk, c_tile, m_blk)
    xs = jnp.sum(x, axis=0)
    xsq = jnp.sum(x * x, axis=0)
    sum_sc[...] += jnp.sum(xs, axis=1, keepdims=True)
    sumsq_sc[...] += jnp.sum(xsq, axis=1, keepdims=True)

    @pl.when(jnp.logical_and(ni == pl.num_programs(1) - 1,
                             mi == pl.num_programs(2) - 1))
    def _finalize():
        mean = sum_sc[...] * inv_count            # divisor = full N*H*W
        var = jnp.maximum(sumsq_sc[...] * inv_count - mean * mean, 0.0)
        inv_std = jax.lax.rsqrt(var + BN_EPS)
        p = p_ref[...]
        wgt, bia, msk = p[:, 0:1], p[:, 1:2], p[:, 2:3]
        scale = inv_std * wgt * msk
        shift = (bia - mean * inv_std * wgt) * msk
        ss_ref[...] = jnp.concatenate([scale, shift], axis=1)


def _bn_mask_apply_kernel(x_ref, ss_ref, o_ref):
    """Fully parallel normalize+mask: out = x * scale + shift (per channel)."""
    x = x_ref[...].astype(jnp.float32)
    ss = ss_ref[...]                              # (c_tile, 2)
    scale = ss[:, 0:1][None]                      # (1, c_tile, 1)
    shift = ss[:, 1:2][None]
    o_ref[...] = (x * scale + shift).astype(o_ref.dtype)


# ---------------------------------------------------------------------------
# Wrapper
# ---------------------------------------------------------------------------
def bn2d_w_mask(x_nchw, weight, bias, bn_mask, *, max_block_elems=None):
    """x_nchw: (N, C, H, W); weight/bias: (C,); bn_mask: (C,) or (1,C,1,1).
    Returns (N, C, H, W) in the input dtype."""
    n, c, h, w = x_nchw.shape
    hw = h * w
    # Free, contiguous reshape of NCHW -- no HBM transpose, no dtype change.
    x3 = x_nchw.reshape(n, c, hw)
    # Pack the three per-channel vectors into one (C, 3) f32 array: one tiny DMA/tile.
    params = jnp.stack(
        [weight.reshape(-1).astype(jnp.float32),
         bias.reshape(-1).astype(jnp.float32),
         bn_mask.reshape(-1).astype(jnp.float32)],
        axis=1)

    vmem_limit = _derive_vmem_limit_bytes()
    # Live set ~= 4 block copies (double-buffered input + double-buffered output).
    # Count 4 B/elem even for bf16 so the in-kernel f32 temporaries are covered.
    elem_budget = max((vmem_limit - _HEADROOM_BYTES) // (4 * 4), 64 * 1024)
    if max_block_elems is not None:
        elem_budget = min(elem_budget, int(max_block_elems))

    c_tile = _choose_c_tile(c)
    grid_c = c // c_tile
    inv_count = 1.0 / float(n * hw)               # full reduction length (biased var)

    if n * c_tile * hw <= elem_budget:
        # --- Single-read path: stats + normalize in one visit per channel tile. ---
        out3 = pl.pallas_call(
            functools.partial(_bn_mask_single_read_kernel, inv_count),
            out_shape=jax.ShapeDtypeStruct((n, c, hw), x3.dtype),
            grid_spec=pltpu.PrefetchScalarGridSpec(
                num_scalar_prefetch=0,
                grid=(grid_c,),
                in_specs=[
                    pl.BlockSpec((n, c_tile, hw), lambda ci: (0, ci, 0)),
                    pl.BlockSpec((c_tile, 3), lambda ci: (ci, 0)),
                ],
                out_specs=pl.BlockSpec((n, c_tile, hw), lambda ci: (0, ci, 0)),
            ),
            compiler_params=pltpu.CompilerParams(
                dimension_semantics=("parallel",),
                vmem_limit_bytes=vmem_limit),
        )(x3, params)
        return out3.reshape(n, c, h, w)

    # --- Streaming regime: stats call, then a fully-parallel apply call. ---
    n_blk, m_blk = _choose_stream_block(n, c_tile, hw, elem_budget)
    n_steps = n // n_blk
    m_steps = hw // m_blk

    # Call 1: per-channel [scale, shift]. Output is tiny: (C, 2) f32.
    scale_shift = pl.pallas_call(
        functools.partial(_bn_mask_stats_kernel, inv_count),
        out_shape=jax.ShapeDtypeStruct((c, 2), jnp.float32),
        grid_spec=pltpu.PrefetchScalarGridSpec(
            num_scalar_prefetch=0,
            grid=(grid_c, n_steps, m_steps),
            in_specs=[
                pl.BlockSpec((n_blk, c_tile, m_blk), lambda ci, ni, mi: (ni, ci, mi)),
                pl.BlockSpec((c_tile, 3), lambda ci, ni, mi: (ci, 0)),
            ],
            out_specs=pl.BlockSpec((c_tile, 2), lambda ci, ni, mi: (ci, 0)),
            scratch_shapes=[pltpu.VMEM((c_tile, 1), jnp.float32)] * 2,
        ),
        compiler_params=pltpu.CompilerParams(
            dimension_semantics=("parallel", "arbitrary", "arbitrary"),
            vmem_limit_bytes=vmem_limit),
    )(x3, params)

    # Call 2: stream x once more and write the normalized/masked output.
    out3 = pl.pallas_call(
        _bn_mask_apply_kernel,
        out_shape=jax.ShapeDtypeStruct((n, c, hw), x3.dtype),
        grid_spec=pltpu.PrefetchScalarGridSpec(
            num_scalar_prefetch=0,
            grid=(grid_c, n_steps, m_steps),
            in_specs=[
                pl.BlockSpec((n_blk, c_tile, m_blk), lambda ci, ni, mi: (ni, ci, mi)),
                pl.BlockSpec((c_tile, 2), lambda ci, ni, mi: (ci, 0)),
            ],
            out_specs=pl.BlockSpec((n_blk, c_tile, m_blk),
                                   lambda ci, ni, mi: (ni, ci, mi)),
        ),
        compiler_params=pltpu.CompilerParams(
            dimension_semantics=("parallel", "parallel", "parallel"),
            vmem_limit_bytes=vmem_limit),
    )(x3, scale_shift)

    return out3.reshape(n, c, h, w)


# ---------------------------------------------------------------------------
# Reference + test
# ---------------------------------------------------------------------------
def _reference(x_nchw, weight, bias, bn_mask):
    xf = x_nchw.astype(jnp.float32)
    mean = jnp.mean(xf, axis=(0, 2, 3), keepdims=True)
    var = jnp.mean((xf - mean) ** 2, axis=(0, 2, 3), keepdims=True)
    y = (xf - mean) / jnp.sqrt(var + BN_EPS)
    y = y * weight.reshape(1, -1, 1, 1) + bias.reshape(1, -1, 1, 1)
    return y * bn_mask.reshape(1, -1, 1, 1)


if __name__ == "__main__":
    key = jax.random.PRNGKey(0)
    kx, kw, kb = jax.random.split(key, 3)

    N, C, H, W = 2, 4, 16, 16
    x = jax.random.normal(kx, (N, C, H, W), dtype=jnp.float32)

    # Deterministic synthetic BatchNorm2d params (channel count = bn.weight.shape[0]).
    weight = 1.0 + 0.1 * jax.random.normal(kw, (C,), dtype=jnp.float32)
    bias = 0.1 * jax.random.normal(kb, (C,), dtype=jnp.float32)
    # bn_mask buffer (registered as ones of shape (1,C,1,1)); prune one channel.
    bn_mask = jnp.array([1.0, 0.0, 1.0, 1.0], dtype=jnp.float32)

    ref = _reference(x, weight, bias, bn_mask)

    # Default path: single-read (full (N, c_tile, H*W) block fits the VMEM budget).
    out = jax.block_until_ready(bn2d_w_mask(x, weight, bias, bn_mask))
    assert out.shape == (N, C, H, W) and out.dtype == x.dtype
    assert jnp.allclose(out, ref, atol=1e-4, rtol=1e-4)

    # Forced streaming regime (tiny block budget) to exercise stats + apply calls.
    out2 = jax.block_until_ready(
        bn2d_w_mask(x, weight, bias, bn_mask, max_block_elems=N * C * 128))
    assert jnp.allclose(out2, ref, atol=1e-4, rtol=1e-4)

    # Native bf16 in/out on the wire; stats in f32 in-kernel.
    xb = x.astype(jnp.bfloat16)
    outb = jax.block_until_ready(bn2d_w_mask(xb, weight, bias, bn_mask))
    assert outb.dtype == jnp.bfloat16
    refb = _reference(xb, weight, bias, bn_mask)
    assert jnp.allclose(outb.astype(jnp.float32), refb, atol=5e-2, rtol=5e-2)

    print("KERNEL_OK")
</pallas_src>

<mosaic_0001>
module attributes {stable_mosaic.version = 11 : i64} {
  func.func @_bn_mask_single_read_kernel(%arg0: i32, %arg1: memref<2x4x256xf32, #tpu.memory_space<vmem>>, %arg2: memref<4x3xf32, #tpu.memory_space<vmem>>, %arg3: memref<2x4x256xf32, #tpu.memory_space<vmem>>) attributes {dimension_semantics = [#tpu.dimension_semantics<parallel>], iteration_bounds = array<i64: 1>, scalar_prefetch = 0 : i64, scratch_operands = 0 : i64, tpu.core_type = #tpu.core_type<tc>, window_params = [{transform_indices = @transform_0, window_bounds = array<i64: 2, 4, 256>}, {transform_indices = @transform_1, window_bounds = array<i64: 4, 3>}, {transform_indices = @transform_2, window_bounds = array<i64: 2, 4, 256>}]} {
    %c0 = arith.constant 0 : index
    %c0_0 = arith.constant 0 : index
    %c0_1 = arith.constant 0 : index
    %0 = vector.load %arg1[%c0, %c0_0, %c0_1] : memref<2x4x256xf32, #tpu.memory_space<vmem>>, vector<2x4x256xf32>
    %cst = arith.constant dense<0.000000e+00> : vector<4x256xf32>
    %1 = vector.multi_reduction <add>, %0, %cst [0] : vector<2x4x256xf32> to vector<4x256xf32>
    %2 = arith.mulf %0, %0 : vector<2x4x256xf32>
    %cst_2 = arith.constant dense<0.000000e+00> : vector<4x256xf32>
    %3 = vector.multi_reduction <add>, %2, %cst_2 [0] : vector<2x4x256xf32> to vector<4x256xf32>
    %cst_3 = arith.constant dense<0.000000e+00> : vector<4xf32>
    %4 = vector.multi_reduction <add>, %1, %cst_3 [1] : vector<4x256xf32> to vector<4xf32>
    %5 = vector.shape_cast %4 : vector<4xf32> to vector<4x1xf32>
    %cst_4 = arith.constant 0.001953125 : f32
    %6 = vector.broadcast %cst_4 : f32 to vector<4x1xf32>
    %7 = arith.mulf %5, %6 : vector<4x1xf32>
    %cst_5 = arith.constant dense<0.000000e+00> : vector<4xf32>
    %8 = vector.multi_reduction <add>, %3, %cst_5 [1] : vector<4x256xf32> to vector<4xf32>
    %9 = vector.shape_cast %8 : vector<4xf32> to vector<4x1xf32>
    %cst_6 = arith.constant 0.001953125 : f32
    %10 = vector.broadcast %cst_6 : f32 to vector<4x1xf32>
    %11 = arith.mulf %9, %10 : vector<4x1xf32>
    %12 = arith.mulf %7, %7 : vector<4x1xf32>
    %13 = arith.subf %11, %12 : vector<4x1xf32>
    %cst_7 = arith.constant 0.000000e+00 : f32
    %14 = vector.broadcast %cst_7 : f32 to vector<4x1xf32>
    %15 = arith.maximumf %13, %14 : vector<4x1xf32>
    %cst_8 = arith.constant 9.99999974E-6 : f32
    %16 = vector.broadcast %cst_8 : f32 to vector<4x1xf32>
    %17 = arith.addf %15, %16 : vector<4x1xf32>
    %18 = math.rsqrt %17 : vector<4x1xf32>
    %c0_9 = arith.constant 0 : index
    %c0_10 = arith.constant 0 : index
    %19 = vector.load %arg2[%c0_9, %c0_10] : memref<4x3xf32, #tpu.memory_space<vmem>>, vector<4x3xf32>
    %20 = vector.extract_strided_slice %19 {offsets = [0, 0], sizes = [4, 1], strides = [1, 1]} : vector<4x3xf32> to vector<4x1xf32>
    %21 = vector.extract_strided_slice %19 {offsets = [0, 1], sizes = [4, 1], strides = [1, 1]} : vector<4x3xf32> to vector<4x1xf32>
    %22 = vector.extract_strided_slice %19 {offsets = [0, 2], sizes = [4, 1], strides = [1, 1]} : vector<4x3xf32> to vector<4x1xf32>
    %23 = arith.mulf %18, %20 : vector<4x1xf32>
    %24 = arith.mulf %23, %22 : vector<4x1xf32>
    %25 = vector.shape_cast %24 : vector<4x1xf32> to vector<1x4x1xf32>
    %26 = arith.mulf %7, %18 : vector<4x1xf32>
    %27 = arith.mulf %26, %20 : vector<4x1xf32>
    %28 = arith.subf %21, %27 : vector<4x1xf32>
    %29 = arith.mulf %28, %22 : vector<4x1xf32>
    %30 = vector.shape_cast %29 : vector<4x1xf32> to vector<1x4x1xf32>
    %31 = vector.broadcast %25 : vector<1x4x1xf32> to vector<2x4x256xf32>
    %32 = arith.mulf %0, %31 : vector<2x4x256xf32>
    %33 = vector.broadcast %30 : vector<1x4x1xf32> to vector<2x4x256xf32>
    %34 = arith.addf %32, %33 : vector<2x4x256xf32>
    %c0_11 = arith.constant 0 : index
    %c0_12 = arith.constant 0 : index
    %c0_13 = arith.constant 0 : index
    %35 = vector.load %arg3[%c0_11, %c0_12, %c0_13] : memref<2x4x256xf32, #tpu.memory_space<vmem>>, vector<2x4x256xf32>
    tpu.vector_store %arg3[%c0_11, %c0_12, %c0_13], %34 {strides = array<i32>} : memref<2x4x256xf32, #tpu.memory_space<vmem>>, vector<2x4x256xf32>,
    return
  }
  func.func @transform_0(%arg0: i32) -> (i32, i32, i32) {
    %c0_i32 = arith.constant 0 : i32
    %c0_i32_0 = arith.constant 0 : i32
    %c0_i32_1 = arith.constant 0 : i32
    return %c0_i32, %arg0, %c0_i32_0 : i32, i32, i32
  }
  func.func @transform_1(%arg0: i32) -> (i32, i32) {
    %c0_i32 = arith.constant 0 : i32
    %c0_i32_0 = arith.constant 0 : i32
    return %arg0, %c0_i32 : i32, i32
  }
  func.func @transform_2(%arg0: i32) -> (i32, i32, i32) {
    %c0_i32 = arith.constant 0 : i32
    %c0_i32_0 = arith.constant 0 : i32
    %c0_i32_1 = arith.constant 0 : i32
    return %c0_i32, %arg0, %c0_i32_0 : i32, i32, i32
  }
}

</mosaic_0001>

<llo_original>
// kernel: tpu_custom_call.1
$region0: #{tpu_custom_call.1}
  #allocation0 [shape = 'u32[]', space=smem, size = 0x4, offset = 0x4, fixed_abs, tag = 'smem constant byte address 0x4 - core index']
  #allocation1 [shape = 'u32[144,128]{1,0:T(1,128)}', space=vmem, size = 0x12000, scoped, tag = 'internal scratch']
  %s0 = inlined_call_operand.hbm [shape: f32[2,4,256], index: 0, kind: input, shape index: {}]
  %s1 = inlined_call_operand.hbm [shape: f32[4,3], index: 1, kind: input, shape index: {}]
  %s2 = inlined_call_operand.hbm [shape: f32[2,4,256], index: 2, kind: output, shape index: {}]
  %s3 = sld [smem:[#allocation0]]
  $region26: #{tpu_custom_call.1} parent=0
    _
  %s5 = ssub.s32 1, %s3
  %s6 = scalar_select 0, %s5, %s3
  $region1: #{tpu_custom_call.1} parent=0
    #allocation2 [shape = 'u8[8192]{0}', space=vmem, size = 0x2000, scoped, tag = 'input window, operand 0, single buffered']
    #allocation3 [shape = 's32[1]{0}', space=sflag, size = 0x4, scoped, tag = 'scoped memory for tpu_custom_call.1']
    #allocation4 [shape = 's32[1]{0}', space=sflag, size = 0x4, scoped, tag = 'scoped memory for tpu_custom_call.1']
    #allocation5 [shape = 'u8[2048]{0}', space=vmem, size = 0x800, scoped, tag = 'input window, operand 1, single buffered']
    #allocation6 [shape = 's32[1]{0}', space=sflag, size = 0x4, scoped, tag = 'scoped memory for tpu_custom_call.1']
    #allocation7 [shape = 'u8[8192]{0}', space=vmem, size = 0x2000, scoped, tag = 'output window, operand 0, single buffered']
    %7 = vsyncpa [#allocation3], 0
    %8 = vsyncpa [#allocation6], 0
    %9 = vsyncpa [#allocation4], 0
    // Predicated region
    $region2: #{tpu_custom_call.1} parent=1 // pred_check
      _
    $region3: #{tpu_custom_call.1} parent=1 // pred_check_branch
      %11 = sbr.rel (0) target = $region5
    $region4: #{tpu_custom_call.1} parent=1 // pred_region
      %s13 = ssub.s32 256, 256
      %14 = vsyncadd [#allocation3], %s13
      %s15 = sshll.u32 [#allocation2], 4
      %s16 = int_to_ptr.vmem [resolvable:$true] %s15
      %21 = dma.hbm_to_vmem [thread:$0]  %s0, 256, %s16, [#allocation3], 128, 128, 8
    $region5: #{tpu_custom_call.1} parent=1 // pred_fallthru
      _
    // Predicated region
    $region6: #{tpu_custom_call.1} parent=1 // pred_check
      _
    $region7: #{tpu_custom_call.1} parent=1 // pred_check_branch
      %23 = sbr.rel (0) target = $region9
    $region8: #{tpu_custom_call.1} parent=1 // pred_region
      %s25 = ssub.s32 64, 64
      %26 = vsyncadd [#allocation6], %s25
      %s28 = sshll.u32 [#allocation5], 4
      %s29 = int_to_ptr.vmem [resolvable:$true] %s28
      %31 = dma.hbm_to_vmem [thread:$0]  %s1, 64, %s29, [#allocation6]
    $region9: #{tpu_custom_call.1} parent=1 // pred_fallthru
      _
    // Predicated region
    $region10: #{tpu_custom_call.1} parent=1 // pred_check
      _
    $region11: #{tpu_custom_call.1} parent=1 // pred_check_branch
      %33 = sbr.rel (0) target = $region13
    $region12: #{tpu_custom_call.1} parent=1 // pred_region
      %34 = dma.done [#allocation3], 256
    $region13: #{tpu_custom_call.1} parent=1 // pred_fallthru
      _
    // Predicated region
    $region14: #{tpu_custom_call.1} parent=1 // pred_check
      _
    $region15: #{tpu_custom_call.1} parent=1 // pred_check_branch
      %36 = sbr.rel (0) target = $region17
    $region16: #{tpu_custom_call.1} parent=1 // pred_region
      %37 = dma.done [#allocation6], 64
    $region17: #{tpu_custom_call.1} parent=1 // pred_fallthru
      _
    %v38 = vld [vmem:[#allocation2] sm:$0xff]
    %v39 = vld [vmem:[#allocation2 + $0x8] sm:$0xff]
    %v42 = vcombine.high %v38, %v38
    %v43 = vcombine.high %v39, %v39
    %vm46 = vcmask 1043456
    %v47 = vsel %vm46, %v38, 0.0
    %v48 = vsel %vm46, %v39, 0.0
    %v49 = vadd.f32 %v47, %v48
    %v50 = vsel %vm46, %v42, 0.0
    %v51 = vsel %vm46, %v43, 0.0
    %v52 = vadd.f32 %v50, %v51
    %v53 = vmul.f32 %v38, %v38
    %v54 = vmul.f32 %v39, %v39
    %v57 = vcombine.high %v53, %v53
    %v58 = vcombine.high %v54, %v54
    %v61 = vsel %vm46, %v53, 0.0
    %v62 = vsel %vm46, %v54, 0.0
    %v63 = vadd.f32 %v61, %v62
    %v64 = vsel %vm46, %v57, 0.0
    %v65 = vsel %vm46, %v58, 0.0
    %v66 = vadd.f32 %v64, %v65
    %v67 = vsel %vm46, %v49, 0.0
    %v68 = vsel %vm46, %v52, 0.0
    %v69 = vadd.f32 %v67, %v68
    %70 = vadd.xlane.f32.xlu0 %v69
    %v71 = vpop.xlane.xlu0 %70
    %v72 = vmul.f32 %v71, 0.001953125
    %v73 = vsel %vm46, %v63, 0.0
    %v74 = vsel %vm46, %v66, 0.0
    %v75 = vadd.f32 %v73, %v74
    %76 = vadd.xlane.f32.xlu0 %v75
    %v77 = vpop.xlane.xlu0 %76
    %v78 = vmul.f32 %v77, 0.001953125
    %v79 = vmul.f32 %v72, %v72
    %v80 = vsub.f32 %v78, %v79
    %v81 = vmax.f32 %v80, 0.0
    %v82 = vadd.f32 %v81, 1e-05
    %v83 = vrsqrt.pop %v82
    %v84 = vld [vmem:[#allocation5] sm:$0xf]
    %v85 = vmul.f32 %v83, %v84
    %87 = vrot.lane.b32.xlu0 %v84, 126
    %v88 = vpop.permute.xlu0 %87
    %v90 = vmul.f32 %v85, %v88
    %v91 = vmul.f32 %v72, %v83
    %v92 = vmul.f32 %v91, %v84
    %94 = vrot.lane.b32.xlu0 %v92, 1
    %v95 = vpop.permute.xlu0 %94
    %v97 = vsub.f32 %v84, %v95
    %98 = vrot.lane.b32.xlu0 %v84, 127
    %v99 = vpop.permute.xlu0 %98
    %v101 = vmul.f32 %v97, %v99
    %103 = vset.pattern.permute.xlu0 0
    %104 = vperm.xlu0 %103, %v90
    %v105 = vpop.permute.xlu0 %104
    %v107 = vunpack.c.l.s4 839922192
    %v108 = vunpack.c.0.s8 %v107
    %v109 = vlaneseq
    %v110 = vshrl.u32 %v109, 7
    %v111 = vsub.s32 %v108, %v110
    %v112 = vrot.slane %v105, %v111
    %v114 = vmul.f32 %v38, %v112
    %v115 = vmul.f32 %v39, %v112
    %117 = vset.pattern.permute.xlu0 1
    %118 = vperm.xlu0 %117, %v101
    %v119 = vpop.permute.xlu0 %118
    %v121 = vunpack.c.l.s4 839922192
    %v122 = vunpack.c.0.s8 %v121
    %v123 = vlaneseq
    %v124 = vshrl.u32 %v123, 7
    %v125 = vsub.s32 %v122, %v124
    %v126 = vrot.slane %v119, %v125
    %v128 = vadd.f32 %v114, %v126
    %v129 = vadd.f32 %v115, %v126
    %130 = vst [vmem:[#allocation7] sm:$0xff] %v128
    %131 = vst [vmem:[#allocation7 + $0x8] sm:$0xff] %v129
    // Predicated region
    $region18: #{tpu_custom_call.1} parent=1 // pred_check
      _
    $region19: #{tpu_custom_call.1} parent=1 // pred_check_branch
      %133 = sbr.rel (0) target = $region21
    $region20: #{tpu_custom_call.1} parent=1 // pred_region
      %s135 = ssub.s32 256, 256
      %136 = vsyncadd [#allocation4], %s135
      %s137 = sshll.u32 [#allocation7], 4
      %s138 = int_to_ptr.vmem [resolvable:$true] %s137
      %143 = dma.vmem_to_hbm [thread:$0]  %s138, 256, %s2, [#allocation4], 128, 128, 8
    $region21: #{tpu_custom_call.1} parent=1 // pred_fallthru
      _
    // Predicated region
    $region22: #{tpu_custom_call.1} parent=1 // pred_check
      _
    $region23: #{tpu_custom_call.1} parent=1 // pred_check_branch
      %145 = sbr.rel (0) target = $region25
    $region24: #{tpu_custom_call.1} parent=1 // pred_region
      %146 = dma.done [#allocation4], 256
    $region25: #{tpu_custom_call.1} parent=1 // pred_fallthru
      _
    %147 = vsyncpa [#allocation3], 1
    %148 = vsyncpa [#allocation6], 1
    %149 = vsyncpa [#allocation4], 1

</llo_original>
